<compile_context>
chip_gen: v5e
topology: v5e:2x2
jax: 0.10.0
libtpu: 0.0.40
codegen_flags: <defaults>
</compile_context>

<pallas_src>
import math

import jax
import jax.numpy as jnp
from jax.experimental import pallas as pl
from jax.experimental.pallas import tpu as pltpu

_LANE = 128
_MAX_TILE_BYTES = 4 * 1024 * 1024       # per-buffer block budget (x and out)
_VMEM_LIMIT_BYTES = 40 * 1024 * 1024    # ~16 MiB double-buffered + headroom


def _drop_path_kernel(mask_ref, x_ref, o_ref):
    """o = x * mask (broadcast over rows/lanes) for one (bB, tR, L) block.

    mask_ref: (bB, 1, 1) in x.dtype -- per-sample multiplier, already
              1/keep_prob-scaled in the wrapper.
    x_ref / o_ref: (bB, tR, L), lane-dense last dim.
    """
    o_ref[...] = x_ref[...] * mask_ref[...]


def _drop_path_apply(x, mask):
    """Apply a per-sample multiplier. x: (B, ...); mask: (B,)."""
    orig_shape = x.shape
    B = orig_shape[0]
    M = math.prod(orig_shape[1:]) if len(orig_shape) > 1 else 1

    x2 = x.reshape(B, M)
    # Pad the per-sample length to a multiple of 128 so stores are unmasked
    # lane-dense vst and there is never an arbitrarily large fallback block.
    M_pad = -(-M // _LANE) * _LANE
    if M_pad != M:
        x2 = jnp.pad(x2, ((0, 0), (0, M_pad - M)))

    # Widen the lane dim as far as it cleanly divides the padded length.
    L = _LANE
    while L * 2 <= 2048 and M_pad % (L * 2) == 0:
        L *= 2
    R = M_pad // L
    x3 = x2.reshape(B, R, L)

    itemsize = x.dtype.itemsize
    sample_bytes = R * L * itemsize
    # Sublane packing granularity: 8 rows (f32), 16 (bf16), 32 (int8/fp8).
    row_align = 8 * max(1, 4 // itemsize)

    if sample_bytes <= _MAX_TILE_BYTES:
        # Pack several whole samples per block so tiles stay multi-MiB even
        # when each sample's activation slab is small.
        tR = R
        bB = max(1, min(B, _MAX_TILE_BYTES // max(1, sample_bytes)))
        if B >= 2:
            # Keep at least 2 grid steps along a parallel axis for v7x's 2 TCs.
            bB = min(bB, -(-B // 2))
    else:
        bB = 1
        tR = (_MAX_TILE_BYTES // (L * itemsize)) // row_align * row_align
        tR = max(row_align, min(tR, R))

    grid = (pl.cdiv(B, bB), pl.cdiv(R, tR))

    # Mask in x.dtype: multiply stays packed for sub-32-bit inputs and matches
    # the PyTorch impl (mask created/divided in x.dtype).
    mask3 = mask.astype(x.dtype).reshape(B, 1, 1)

    out3 = pl.pallas_call(
        _drop_path_kernel,
        out_shape=jax.ShapeDtypeStruct((B, R, L), x.dtype),
        grid=grid,
        in_specs=[
            pl.BlockSpec((bB, 1, 1), lambda b, r: (b, 0, 0)),   # per-sample mask
            pl.BlockSpec((bB, tR, L), lambda b, r: (b, r, 0)),  # x tile
        ],
        out_specs=pl.BlockSpec((bB, tR, L), lambda b, r: (b, r, 0)),
        compiler_params=pltpu.CompilerParams(
            dimension_semantics=("parallel", "parallel"),
            vmem_limit_bytes=_VMEM_LIMIT_BYTES),
    )(mask3, x3)

    out = out3.reshape(B, M_pad)
    if M_pad != M:
        out = out[:, :M]
    return out.reshape(orig_shape)


def drop_path_mask(key, batch, drop_prob, scale_by_keep=True):
    """Per-sample keep mask, scaled by 1/keep_prob like the PyTorch impl."""
    keep_prob = 1.0 - drop_prob
    mask = jax.random.bernoulli(key, p=keep_prob, shape=(batch,)).astype(jnp.float32)
    if keep_prob > 0.0 and scale_by_keep:
        mask = mask / keep_prob
    return mask


def drop_path(x, key, drop_prob=0.0, training=False, scale_by_keep=True):
    """Functional equivalent of DropPath.forward (training flag explicit)."""
    if drop_prob == 0.0 or not training:
        return x  # identity short-circuit, same as the PyTorch module
    mask = drop_path_mask(key, x.shape[0], drop_prob, scale_by_keep)
    return _drop_path_apply(x, mask)


def _reference(x, mask):
    """Pure-JAX reference mirroring the PyTorch forward (given the same mask)."""
    shape = (x.shape[0],) + (1,) * (x.ndim - 1)
    return x * mask.reshape(shape).astype(x.dtype)


if __name__ == "__main__":
    key = jax.random.PRNGKey(0)
    k_x, k_mask = jax.random.split(key)

    drop_prob = 0.5

    # Token-style input: batch=2, seq=8, hidden=32.
    B, S, D = 2, 8, 32
    x = jax.random.normal(k_x, (B, S, D), dtype=jnp.float32)
    mask = drop_path_mask(k_mask, B, drop_prob, scale_by_keep=True)
    out = jax.block_until_ready(_drop_path_apply(x, mask))
    ref = _reference(x, mask)
    assert out.shape == ref.shape and out.dtype == ref.dtype
    assert jnp.allclose(out, ref, atol=1e-6, rtol=1e-6)

    # Public wrapper with the same key matches.
    out2 = jax.block_until_ready(
        drop_path(x, k_mask, drop_prob=drop_prob, training=True, scale_by_keep=True))
    assert jnp.allclose(out2, ref, atol=1e-6, rtol=1e-6)

    # Eval mode / drop_prob == 0 is an identity pass-through (no kernel).
    assert drop_path(x, k_mask, drop_prob=drop_prob, training=False) is x
    assert drop_path(x, k_mask, drop_prob=0.0, training=True) is x

    # 4-D input (conv feature maps) goes through the same lane-dense path.
    x4 = jax.random.normal(k_x, (2, 4, 16, 16), dtype=jnp.float32)
    mask4 = drop_path_mask(k_mask, 2, drop_prob, scale_by_keep=True)
    out4 = jax.block_until_ready(_drop_path_apply(x4, mask4))
    assert jnp.allclose(out4, _reference(x4, mask4), atol=1e-6, rtol=1e-6)

    # Non-128-divisible per-sample length exercises the pad-and-slice path.
    x_odd = jax.random.normal(k_x, (2, 5, 7), dtype=jnp.float32)
    mask_odd = drop_path_mask(k_mask, 2, drop_prob, scale_by_keep=True)
    out_odd = jax.block_until_ready(_drop_path_apply(x_odd, mask_odd))
    assert jnp.allclose(out_odd, _reference(x_odd, mask_odd), atol=1e-6, rtol=1e-6)

    # bf16: multiply happens in the input dtype (stays packed).
    xb = x.astype(jnp.bfloat16)
    outb = jax.block_until_ready(_drop_path_apply(xb, mask))
    refb = _reference(xb, mask)
    assert outb.dtype == jnp.bfloat16
    assert jnp.allclose(outb.astype(jnp.float32), refb.astype(jnp.float32))

    print("KERNEL_OK")
</pallas_src>

<mosaic_0001>
module attributes {stable_mosaic.version = 11 : i64} {
  func.func @_drop_path_kernel(%arg0: i32, %arg1: i32, %arg2: memref<1x1x1xf32, #tpu.memory_space<vmem>>, %arg3: memref<1x1x256xf32, #tpu.memory_space<vmem>>, %arg4: memref<1x1x256xf32, #tpu.memory_space<vmem>>) attributes {dimension_semantics = [#tpu.dimension_semantics<parallel>, #tpu.dimension_semantics<parallel>], iteration_bounds = array<i64: 2, 1>, scalar_prefetch = 0 : i64, scratch_operands = 0 : i64, tpu.core_type = #tpu.core_type<tc>, window_params = [{transform_indices = @transform_0, window_bounds = array<i64: 1, 1, 1>}, {transform_indices = @transform_1, window_bounds = array<i64: 1, 1, 256>}, {transform_indices = @transform_2, window_bounds = array<i64: 1, 1, 256>}]} {
    %c0 = arith.constant 0 : index
    %c0_0 = arith.constant 0 : index
    %c0_1 = arith.constant 0 : index
    %0 = vector.load %arg3[%c0, %c0_0, %c0_1] : memref<1x1x256xf32, #tpu.memory_space<vmem>>, vector<1x1x256xf32>
    %c0_2 = arith.constant 0 : index
    %c0_3 = arith.constant 0 : index
    %c0_4 = arith.constant 0 : index
    %1 = vector.load %arg2[%c0_2, %c0_3, %c0_4] : memref<1x1x1xf32, #tpu.memory_space<vmem>>, vector<1x1x1xf32>
    %2 = vector.broadcast %1 : vector<1x1x1xf32> to vector<1x1x256xf32>
    %3 = arith.mulf %0, %2 : vector<1x1x256xf32>
    %c0_5 = arith.constant 0 : index
    %c0_6 = arith.constant 0 : index
    %c0_7 = arith.constant 0 : index
    %4 = vector.load %arg4[%c0_5, %c0_6, %c0_7] : memref<1x1x256xf32, #tpu.memory_space<vmem>>, vector<1x1x256xf32>
    tpu.vector_store %arg4[%c0_5, %c0_6, %c0_7], %3 {strides = array<i32>} : memref<1x1x256xf32, #tpu.memory_space<vmem>>, vector<1x1x256xf32>,
    return
  }
  func.func @transform_0(%arg0: i32, %arg1: i32) -> (i32, i32, i32) {
    %c0_i32 = arith.constant 0 : i32
    %c0_i32_0 = arith.constant 0 : i32
    %c0_i32_1 = arith.constant 0 : i32
    return %arg0, %c0_i32, %c0_i32_0 : i32, i32, i32
  }
  func.func @transform_1(%arg0: i32, %arg1: i32) -> (i32, i32, i32) {
    %c0_i32 = arith.constant 0 : i32
    %c0_i32_0 = arith.constant 0 : i32
    return %arg0, %arg1, %c0_i32 : i32, i32, i32
  }
  func.func @transform_2(%arg0: i32, %arg1: i32) -> (i32, i32, i32) {
    %c0_i32 = arith.constant 0 : i32
    %c0_i32_0 = arith.constant 0 : i32
    return %arg0, %arg1, %c0_i32 : i32, i32, i32
  }
}

</mosaic_0001>

<llo_original>
// kernel: tpu_custom_call.1
$region0: #{tpu_custom_call.1}
  #allocation0 [shape = 'u32[]', space=smem, size = 0x4, offset = 0x4, fixed_abs, tag = 'smem constant byte address 0x4 - core index']
  #allocation1 [shape = 'u32[72,128]{1,0:T(1,128)}', space=vmem, size = 0x9000, scoped, tag = 'internal scratch']
  %s0 = inlined_call_operand.vmem [shape: f32[2,1,1], index: 0, kind: input, shape index: {}]
  %s1 = inlined_call_operand.hbm [shape: f32[2,1,256], index: 1, kind: input, shape index: {}]
  %s2 = inlined_call_operand.hbm [shape: f32[2,1,256], index: 2, kind: output, shape index: {}]
  %s3 = sld [smem:[#allocation0]]
  $region45: #{tpu_custom_call.1} parent=0
    _
  %s5 = ssub.s32 1, %s3
  %s6 = scalar_select 0, %s5, %s3
  $region1: #{tpu_custom_call.1} parent=0
    #allocation2 [shape = 'u8[2048]{0}', space=vmem, size = 0x800, scoped, tag = 'input window, operand 1']
    #allocation3 [shape = 's32[2]{0}', space=sflag, size = 0x8, scoped, tag = 'scoped memory for tpu_custom_call.1']
    #allocation4 [shape = 's32[2]{0}', space=sflag, size = 0x8, scoped, tag = 'scoped memory for tpu_custom_call.1']
    #allocation5 [shape = 'u8[2048]{0}', space=vmem, size = 0x800, scoped, tag = 'output window, operand 0']
    %7 = vsyncpa [#allocation3], 0
    %s8 = scalar_lea.sflag [#allocation3], 1
    %9 = vsyncpa %s8, 0
    %10 = vsyncpa [#allocation4], 0
    %s11 = scalar_lea.sflag [#allocation4], 1
    %12 = vsyncpa %s11, 0
    loop: start=0, step=1, limit=4
    $region2: #{tpu_custom_call.1} parent=1 // loop_pre_header
      _
    $region3: #{tpu_custom_call.1} parent=1 // loop_header
      %s14 = sphi 0, %s18
      %p15 = scmp.ge.s32.totalorder %s14, 4
      %s21 = sphi 0, %s33
      %s22 = sphi 0, %s29
      %s23 = sphi 0, %s21
      %s24 = sphi 0, %s22
      %s25 = sphi 0, %s23
      %s26 = sphi 0, %s24
      %s36 = sphi 0, %s38
      %s39 = sphi 0, %s36
      %s40 = sphi 0, %s39
      %s56 = sphi 0, %s40
      %s64 = sphi 0, %s66
      %s67 = sphi 0, %s64
      %s68 = sphi 0, %s67
      %s84 = sphi 0, %s68
      %s92 = sphi 0, %s94
      %s95 = sphi 0, %s92
      %s96 = sphi 0, %s95
      %s112 = sphi 0, %s96
    $region4: #{tpu_custom_call.1} parent=1 // loop_header_branch
      %17 = sbr.rel (%p15) target = $region8
    $region5: #{tpu_custom_call.1} parent=1 // loop_body
      %s19 = ssub.s32 %s14, 1
      %s20 = ssub.s32 %s14, 2
      %s27 = sadd.s32 1, %s22
      %p28 = scmp.ge.s32.totalorder %s27, 1
      %s29 = scalar_select %p28, 0, %s27
      %s30 = sadd.s32 1, %s21
      %s31 = scalar_select %p28, %s30, %s21
      %p32 = scmp.ge.s32.totalorder %s31, 2
      %s33 = scalar_select %p32, 0, %s31
      %s34 = ssub.s32 %s21, %s33
      %p35 = scmp.eq.s32.totalorder %s34, 0
      %s37 = sadd.s32 %s36, 1
      %s38 = scalar_select %p35, %s36, %s37
      %p41 = pneg %p35
      %p42 = scmp.eq.s32.totalorder %s14, 1
      %p43 = por %p41, %p42
      %p44 = scmp.ne.s32.totalorder %s36, %s39
      %p45 = scmp.eq.s32.totalorder %s14, 0
      %p46 = por %p44, %p45
      %p47 = scmp.ne.s32.totalorder %s36, %s39
      %p48 = scmp.eq.s32.totalorder %s19, 1
      %p49 = por %p47, %p48
      %p50 = scmp.ne.s32.totalorder %s39, %s40
      %p51 = scmp.eq.s32.totalorder %s19, 0
      %p52 = por %p50, %p51
      %p53 = scmp.ne.s32.totalorder %s39, %s40
      %p54 = scmp.eq.s32.totalorder %s20, 1
      %p55 = por %p53, %p54
      %p57 = scmp.ne.s32.totalorder %s40, %s56
      %p58 = scmp.eq.s32.totalorder %s20, 0
      %p59 = por %p57, %p58
      %s60 = ssub.s32 %s21, %s33
      %s61 = ssub.s32 %s22, %s29
      %s62 = sor.u32 %s60, %s61
      %p63 = scmp.eq.s32.totalorder %s62, 0
      %s65 = sadd.s32 %s64, 1
      %s66 = scalar_select %p63, %s64, %s65
      %p69 = pneg %p63
      %p70 = scmp.eq.s32.totalorder %s14, 1
      %p71 = por %p69, %p70
      %p72 = scmp.ne.s32.totalorder %s64, %s67
      %p73 = scmp.eq.s32.totalorder %s14, 0
      %p74 = por %p72, %p73
      %p75 = scmp.ne.s32.totalorder %s64, %s67
      %p76 = scmp.eq.s32.totalorder %s19, 1
      %p77 = por %p75, %p76
      %p78 = scmp.ne.s32.totalorder %s67, %s68
      %p79 = scmp.eq.s32.totalorder %s19, 0
      %p80 = por %p78, %p79
      %p81 = scmp.ne.s32.totalorder %s67, %s68
      %p82 = scmp.eq.s32.totalorder %s20, 1
      %p83 = por %p81, %p82
      %p85 = scmp.ne.s32.totalorder %s68, %s84
      %p86 = scmp.eq.s32.totalorder %s20, 0
      %p87 = por %p85, %p86
      %s88 = ssub.s32 %s21, %s33
      %s89 = ssub.s32 %s22, %s29
      %s90 = sor.u32 %s88, %s89
      %p91 = scmp.eq.s32.totalorder %s90, 0
      %s93 = sadd.s32 %s92, 1
      %s94 = scalar_select %p91, %s92, %s93
      %p97 = pneg %p91
      %p98 = scmp.eq.s32.totalorder %s14, 1
      %p99 = por %p97, %p98
      %p100 = scmp.ne.s32.totalorder %s92, %s95
      %p101 = scmp.eq.s32.totalorder %s14, 0
      %p102 = por %p100, %p101
      %p103 = scmp.ne.s32.totalorder %s92, %s95
      %p104 = scmp.eq.s32.totalorder %s19, 1
      %p105 = por %p103, %p104
      %p106 = scmp.ne.s32.totalorder %s95, %s96
      %p107 = scmp.eq.s32.totalorder %s19, 0
      %p108 = por %p106, %p107
      %p109 = scmp.ne.s32.totalorder %s95, %s96
      %p110 = scmp.eq.s32.totalorder %s20, 1
      %p111 = por %p109, %p110
      %p113 = scmp.ne.s32.totalorder %s96, %s112
      %p114 = scmp.eq.s32.totalorder %s20, 0
      %p115 = por %p113, %p114
      %p116 = scmp.le.s32.totalorder 1, %s14
      %p117 = scmp.lt.s32.totalorder %s14, 3
      %p118 = pnand %p116, %p117
      %p119 = pneg %p118
      // Predicated region
      $region9: #{tpu_custom_call.1} parent=5 // pred_check
        _
      $region10: #{tpu_custom_call.1} parent=5 // pred_check_branch
        %121 = sbr.rel (%p118) target = $region12
      $region11: #{tpu_custom_call.1} parent=5 // pred_region
        %s122 = ssub.s32 %s14, 1
      $region12: #{tpu_custom_call.1} parent=5 // pred_fallthru
        _
      %p123 = scmp.lt.s32.totalorder %s14, 2
      // Predicated region
      $region13: #{tpu_custom_call.1} parent=5 // pred_check
        %p124 = pneg %p123
      $region14: #{tpu_custom_call.1} parent=5 // pred_check_branch
        %126 = sbr.rel (%p124) target = $region16
      $region15: #{tpu_custom_call.1} parent=5 // pred_region
        // Predicated region
        $region17: #{tpu_custom_call.1} parent=15 // pred_check
          %p127 = pneg %p46
        $region18: #{tpu_custom_call.1} parent=15 // pred_check_branch
          %129 = sbr.rel (%p127) target = $region20
        $region19: #{tpu_custom_call.1} parent=15 // pred_region
          %p130 = scmp.lt.s32.totalorder %s21, 1
          %s131 = scalar_select %p130, %s21, 1
          %s132 = scalar_lea.vmem %s0, %s131
        $region20: #{tpu_custom_call.1} parent=15 // pred_fallthru
          _
        // Predicated region
        $region21: #{tpu_custom_call.1} parent=15 // pred_check
          %p133 = pneg %p74
        $region22: #{tpu_custom_call.1} parent=15 // pred_check_branch
          %135 = sbr.rel (%p133) target = $region24
        $region23: #{tpu_custom_call.1} parent=15 // pred_region
          %s136 = sand.u32 %s64, 1
          %s137 = scalar_lea.sflag [#allocation3], %s136
          %s138 = sand.u32 %s64, 1
          %s139 = smul.addr %s138, 2
          %s140 = scalar_lea.vmem [#allocation2], %s139
          %142 = vsyncadd %s137, 0
          %s143 = smul.addr %s22, 2
          %s144 = smul.addr %s21, 2
          %s145 = sadd.s32 %s143, %s144
          %s146 = scalar_lea.hbm %s1, %s145
          %s148 = sshll.u32 %s146, 4
          %s149 = int_to_ptr.hbm [resolvable:$true] %s148
          %s150 = sshll.u32 %s140, 4
          %s151 = int_to_ptr.vmem [resolvable:$true] %s150
          %153 = dma.hbm_to_vmem [thread:$0]  %s149, 32, %s151, %s137
        $region24: #{tpu_custom_call.1} parent=15 // pred_fallthru
          _
      $region16: #{tpu_custom_call.1} parent=5 // pred_fallthru
        _
      %p154 = scmp.le.s32.totalorder 1, %s14
      %p155 = scmp.lt.s32.totalorder %s14, 3
      %p156 = pnand %p154, %p155
      %p157 = pneg %p156
      // Predicated region
      $region25: #{tpu_custom_call.1} parent=5 // pred_check
        _
      $region26: #{tpu_custom_call.1} parent=5 // pred_check_branch
        %159 = sbr.rel (%p156) target = $region28
      $region27: #{tpu_custom_call.1} parent=5 // pred_region
        %s160 = ssub.s32 %s14, 1
        %s161 = sand.u32 %s67, 1
        %s162 = scalar_lea.sflag [#allocation3], %s161
        %s163 = sand.u32 %s67, 1
        %s164 = smul.addr %s163, 2
        %s165 = scalar_lea.vmem [#allocation2], %s164
        // Predicated region
        $region29: #{tpu_custom_call.1} parent=27 // pred_check
          %p166 = pneg %p80
        $region30: #{tpu_custom_call.1} parent=27 // pred_check_branch
          %168 = sbr.rel (%p166) target = $region32
        $region31: #{tpu_custom_call.1} parent=27 // pred_region
          %170 = dma.done %s162, 32
        $region32: #{tpu_custom_call.1} parent=27 // pred_fallthru
          _
        %p171 = scmp.lt.s32.totalorder %s23, 1
        %s172 = scalar_select %p171, %s23, 1
        %s173 = scalar_lea.vmem %s0, %s172
        %p174 = pneg %p52
        %p175 = pneg %p49
        %s176 = sand.u32 %s67, 1
        %s177 = scalar_lea.sflag [#allocation3], %s176
        %s178 = sand.u32 %s67, 1
        %s179 = smul.addr %s178, 2
        %s180 = scalar_lea.vmem [#allocation2], %s179
        %p181 = pneg %p80
        %p182 = pneg %p77
        %p183 = pneg %p108
        %p184 = pneg %p105
        %s185 = sand.u32 %s95, 1
        %s186 = scalar_lea.sflag [#allocation4], %s185
        %s187 = sand.u32 %s95, 1
        %s188 = smul.addr %s187, 2
        %s189 = scalar_lea.vmem [#allocation5], %s188
        %p190 = scmp.lt.s32.totalorder %s23, 1
        %s191 = scalar_select %p190, %s23, 1
        %s192 = scalar_lea.vmem %s0, %s191
        %v193 = vld [vmem:[%s165] sm:$0x3]
        %v194 = vld [vmem:[%s192] sm:$0x1]
        %196 = vset.pattern.permute.xlu0 0
        %197 = vperm.xlu0 %196, %v194
        %v198 = vpop.permute.xlu0 %197
        %v200 = vperm.slane %v198, 0
        %v201 = vmul.f32 %v193, %v200
        %v202 = vlaneseq
        %vm203 = vcmp.ge.s32.totalorder %v202, 0
        %vm204 = vcmp.lt.s32.totalorder %v202, 256
        %vm205 = vmand %vm203, %vm204
        %206 = vst.msk [vmem:[%s189] sm:$0x3] %vm205, %v201
        %s207 = sand.u32 %s95, 1
        %s208 = scalar_lea.sflag [#allocation4], %s207
        %s209 = sand.u32 %s95, 1
        %s210 = smul.addr %s209, 2
        %s211 = scalar_lea.vmem [#allocation5], %s210
        // Predicated region
        $region33: #{tpu_custom_call.1} parent=27 // pred_check
          %p212 = pneg %p105
        $region34: #{tpu_custom_call.1} parent=27 // pred_check_branch
          %214 = sbr.rel (%p212) target = $region36
        $region35: #{tpu_custom_call.1} parent=27 // pred_region
          %216 = vsyncadd %s208, 0
          %s217 = smul.addr %s24, 2
          %s218 = smul.addr %s23, 2
          %s219 = sadd.s32 %s217, %s218
          %s220 = scalar_lea.hbm %s2, %s219
          %s222 = sshll.u32 %s211, 4
          %s223 = int_to_ptr.vmem [resolvable:$true] %s222
          %s224 = sshll.u32 %s220, 4
          %s225 = int_to_ptr.hbm [resolvable:$true] %s224
          %227 = dma.vmem_to_hbm [thread:$0]  %s223, 32, %s225, %s208
        $region36: #{tpu_custom_call.1} parent=27 // pred_fallthru
          _
      $region28: #{tpu_custom_call.1} parent=5 // pred_fallthru
        _
      %p228 = scmp.le.s32.totalorder 2, %s14
      // Predicated region
      $region37: #{tpu_custom_call.1} parent=5 // pred_check
        %p229 = pneg %p228
      $region38: #{tpu_custom_call.1} parent=5 // pred_check_branch
        %231 = sbr.rel (%p229) target = $region40
      $region39: #{tpu_custom_call.1} parent=5 // pred_region
        %s232 = ssub.s32 %s14, 2
        // Predicated region
        $region41: #{tpu_custom_call.1} parent=39 // pred_check
          %p233 = pneg %p111
        $region42: #{tpu_custom_call.1} parent=39 // pred_check_branch
          %235 = sbr.rel (%p233) target = $region44
        $region43: #{tpu_custom_call.1} parent=39 // pred_region
          %s236 = sand.u32 %s96, 1
          %s237 = scalar_lea.sflag [#allocation4], %s236
          %s238 = sand.u32 %s96, 1
          %s239 = smul.addr %s238, 2
          %s240 = scalar_lea.vmem [#allocation5], %s239
          %242 = dma.done %s237, 32
        $region44: #{tpu_custom_call.1} parent=39 // pred_fallthru
          _
      $region40: #{tpu_custom_call.1} parent=5 // pred_fallthru
        _
    $region6: #{tpu_custom_call.1} parent=1 // loop_footer
      %s18 = sadd.s32 1, %s14
    $region7: #{tpu_custom_call.1} parent=1 // loop_footer_branch
      %13 = sbr.rel target = $region3
    $region8: #{tpu_custom_call.1} parent=1 // loop_exit
      _
    %243 = vsyncpa [#allocation3], 1
    %s244 = scalar_lea.sflag [#allocation3], 1
    %245 = vsyncpa %s244, 1
    %246 = vsyncpa [#allocation4], 1
    %s247 = scalar_lea.sflag [#allocation4], 1
    %248 = vsyncpa %s247, 1

</llo_original>
